<compile_context>
chip_gen: v6e
topology: v6e:2x2x1
jax: 0.10.0
libtpu: 0.0.40
codegen_flags: <defaults>
</compile_context>

<pallas_src>
import math

import jax
import jax.numpy as jnp
from jax.experimental import pallas as pl
from jax.experimental.pallas import tpu as pltpu


def _round_up(x, m):
    return ((x + m - 1) // m) * m


# --------------------------------------------------------------------------
# Kernel 1: h_scaled = diag(d) * relu( diag(d) * (A_tilde @ (diag(d)*x)) @ W1 + b1 )
# (the trailing diag(d) pre-applies the right-normalization needed by layer 2)
# --------------------------------------------------------------------------
def gcn_layer1_kernel(a_ref, xs_ref, drow_ref, w1_ref, b1_ref, hs_ref, acc_ref):
    k = pl.program_id(1)

    @pl.when(k == 0)
    def _():
        acc_ref[...] = jnp.zeros_like(acc_ref)

    # A_tilde tile (bf16 0/1) @ (d*x) tile (bf16), f32 accumulation on the MXU.
    acc_ref[...] += jnp.dot(a_ref[...], xs_ref[...],
                            preferred_element_type=jnp.float32)

    @pl.when(k == pl.num_programs(1) - 1)
    def _():
        # Left D^{-1/2} row scale, then the small feature transform in f32.
        # (A@X)@W1 contraction order kept: N^2 work scales with min(F, H1) and
        # F_pad == H1_pad here; for F >> H1 flip to A@(X@W1).
        ax = drow_ref[...] * acc_ref[...]
        h = jnp.dot(ax, w1_ref[...], preferred_element_type=jnp.float32) + b1_ref[...]
        h = jnp.maximum(h, 0.0)
        # Pre-scale by d for the next propagation; bf16 for the N^2 matmul.
        hs_ref[...] = (drow_ref[...] * h).astype(hs_ref.dtype)


# --------------------------------------------------------------------------
# Kernel 2: [mu | logvar] = diag(d) * (A_tilde @ h_scaled) @ [W_mu | W_lv] + [b_mu | b_lv]
# --------------------------------------------------------------------------
def gcn_layer2_kernel(a_ref, hs_ref, drow_ref, wh_ref, bh_ref, out_ref, acc_ref):
    k = pl.program_id(1)

    @pl.when(k == 0)
    def _():
        acc_ref[...] = jnp.zeros_like(acc_ref)

    acc_ref[...] += jnp.dot(a_ref[...], hs_ref[...],
                            preferred_element_type=jnp.float32)

    @pl.when(k == pl.num_programs(1) - 1)
    def _():
        ah = drow_ref[...] * acc_ref[...]
        out_ref[...] = (jnp.dot(ah, wh_ref[...], preferred_element_type=jnp.float32)
                        + bh_ref[...]).astype(out_ref.dtype)


def hidden_gcn_encoder(x, adj, params, *, tm=256, tk=256):
    """x: [N, F] float32, adj: [N, N] raw (0/1) adjacency, params: dict of weights.

    Tile sizes default to 256 (fits v7x's 64 MiB VMEM with large headroom and
    maps to 128-granular MXU tiles on v5e); raise to 512+ on v5e/v6e for peak
    HBM-roofline utilization on very large graphs.
    """
    n, f_in = x.shape
    h1 = params["w1"].shape[1]
    h2 = params["w_mu"].shape[1]
    h2x2 = 2 * h2

    # --- GCN normalization glue: only the degree vector; A_hat is never built.
    a_tilde = adj + jnp.eye(n, dtype=adj.dtype)
    deg = jnp.sum(a_tilde, axis=1)
    d = jax.lax.rsqrt(jnp.maximum(deg, 1e-12))

    # --- Pad to TPU-friendly shapes (lanes multiple of 128, rows multiple of tiles).
    n_pad = _round_up(n, tm * tk // math.gcd(tm, tk))
    f_pad = _round_up(f_in, 128)
    h1_pad = _round_up(h1, 128)
    ho_pad = _round_up(h2x2, 128)

    a_pad = jnp.zeros((n_pad, n_pad), jnp.bfloat16).at[:n, :n].set(
        a_tilde.astype(jnp.bfloat16))                      # exact: entries are 0/1
    d_pad = jnp.zeros((n_pad, 1), jnp.float32).at[:n, 0].set(d)
    xs = d[:, None] * x                                    # right D^{-1/2} folded into x
    xs_pad = jnp.zeros((n_pad, f_pad), jnp.bfloat16).at[:n, :f_in].set(
        xs.astype(jnp.bfloat16))

    w1_pad = jnp.zeros((f_pad, h1_pad), jnp.float32).at[:f_in, :h1].set(params["w1"])
    b1_pad = jnp.zeros((1, h1_pad), jnp.float32).at[:, :h1].set(params["b1"])

    # Fused mu / logvar heads -> one lane-dense output slab.
    w_heads = jnp.concatenate([params["w_mu"], params["w_lv"]], axis=1)
    b_heads = jnp.concatenate([params["b_mu"], params["b_lv"]], axis=1)
    wh_pad = jnp.zeros((h1_pad, ho_pad), jnp.float32).at[:h1, :h2x2].set(w_heads)
    bh_pad = jnp.zeros((1, ho_pad), jnp.float32).at[:, :h2x2].set(b_heads)

    grid = (n_pad // tm, n_pad // tk)
    cparams = pltpu.CompilerParams(dimension_semantics=("parallel", "arbitrary"))

    # ---------------- Layer 1 ----------------
    hs = pl.pallas_call(
        gcn_layer1_kernel,
        out_shape=jax.ShapeDtypeStruct((n_pad, h1_pad), jnp.bfloat16),
        grid_spec=pltpu.PrefetchScalarGridSpec(
            num_scalar_prefetch=0,
            grid=grid,
            in_specs=[
                pl.BlockSpec((tm, tk), lambda i, k: (i, k)),          # A_tilde tile
                pl.BlockSpec((tk, f_pad), lambda i, k: (k, 0)),       # (d*x) tile
                pl.BlockSpec((tm, 1), lambda i, k: (i, 0)),           # d row scale
                pl.BlockSpec((f_pad, h1_pad), lambda i, k: (0, 0)),   # W1
                pl.BlockSpec((1, h1_pad), lambda i, k: (0, 0)),       # b1
            ],
            out_specs=pl.BlockSpec((tm, h1_pad), lambda i, k: (i, 0)),
            scratch_shapes=[pltpu.VMEM((tm, f_pad), jnp.float32)],
        ),
        compiler_params=cparams,
    )(a_pad, xs_pad, d_pad, w1_pad, b1_pad)

    # ---------------- Layer 2 (propagation + fused mu/logvar heads) ----------------
    out = pl.pallas_call(
        gcn_layer2_kernel,
        out_shape=jax.ShapeDtypeStruct((n_pad, ho_pad), jnp.float32),
        grid_spec=pltpu.PrefetchScalarGridSpec(
            num_scalar_prefetch=0,
            grid=grid,
            in_specs=[
                pl.BlockSpec((tm, tk), lambda i, k: (i, k)),          # A_tilde tile
                pl.BlockSpec((tk, h1_pad), lambda i, k: (k, 0)),      # (d*h) tile
                pl.BlockSpec((tm, 1), lambda i, k: (i, 0)),           # d row scale
                pl.BlockSpec((h1_pad, ho_pad), lambda i, k: (0, 0)),  # [W_mu | W_lv]
                pl.BlockSpec((1, ho_pad), lambda i, k: (0, 0)),       # [b_mu | b_lv]
            ],
            out_specs=pl.BlockSpec((tm, ho_pad), lambda i, k: (i, 0)),
            scratch_shapes=[pltpu.VMEM((tm, h1_pad), jnp.float32)],
        ),
        compiler_params=cparams,
    )(a_pad, hs, d_pad, wh_pad, bh_pad)

    mu = out[:n, :h2]
    logvar = out[:n, h2:h2x2]
    return mu, logvar


def init_params(key, input_feat_dim, hidden_dim1, hidden_dim2):
    k1, k2, k3 = jax.random.split(key, 3)

    def glorot(k, fan_in, fan_out):
        scale = jnp.sqrt(6.0 / (fan_in + fan_out))
        return jax.random.uniform(k, (fan_in, fan_out), jnp.float32, -scale, scale)

    return {
        "w1": glorot(k1, input_feat_dim, hidden_dim1),
        "b1": jnp.zeros((1, hidden_dim1), jnp.float32),
        "w_mu": glorot(k2, hidden_dim1, hidden_dim2),
        "b_mu": jnp.zeros((1, hidden_dim2), jnp.float32),
        "w_lv": glorot(k3, hidden_dim1, hidden_dim2),
        "b_lv": jnp.zeros((1, hidden_dim2), jnp.float32),
    }


def reference(x, adj, params):
    n = x.shape[0]
    a_tilde = adj + jnp.eye(n, dtype=adj.dtype)
    deg = jnp.sum(a_tilde, axis=1)
    d_inv_sqrt = jax.lax.rsqrt(jnp.maximum(deg, 1e-12))
    a_hat = a_tilde * d_inv_sqrt[:, None] * d_inv_sqrt[None, :]
    h = jnp.maximum(a_hat @ x @ params["w1"] + params["b1"], 0.0)
    ah = a_hat @ h
    return ah @ params["w_mu"] + params["b_mu"], ah @ params["w_lv"] + params["b_lv"]


if __name__ == "__main__":
    N, F_IN, H1, H2 = 16, 8, 32, 16

    key = jax.random.PRNGKey(0)
    kx, ka, kp = jax.random.split(key, 3)

    x = jax.random.normal(kx, (N, F_IN), jnp.float32)
    # Deterministic random symmetric 0/1 adjacency with no self-loops.
    upper = (jax.random.uniform(ka, (N, N)) > 0.7).astype(jnp.float32)
    adj = jnp.triu(upper, k=1)
    adj = adj + adj.T

    params = init_params(kp, F_IN, H1, H2)

    mu, logvar = hidden_gcn_encoder(x, adj, params)
    jax.block_until_ready((mu, logvar))

    mu_ref, lv_ref = reference(x, adj, params)
    # bf16 activations (f32 MXU accumulation) vs f32 reference -> loosened tolerance.
    assert jnp.allclose(mu, mu_ref, atol=3e-2, rtol=3e-2)
    assert jnp.allclose(logvar, lv_ref, atol=3e-2, rtol=3e-2)

    print("KERNEL_OK")
</pallas_src>

<mosaic_0001>
module attributes {stable_mosaic.version = 11 : i64} {
  func.func @gcn_layer1_kernel(%arg0: i32, %arg1: i32, %arg2: memref<256x256xbf16, #tpu.memory_space<vmem>>, %arg3: memref<256x128xbf16, #tpu.memory_space<vmem>>, %arg4: memref<256x1xf32, #tpu.memory_space<vmem>>, %arg5: memref<128x128xf32, #tpu.memory_space<vmem>>, %arg6: memref<1x128xf32, #tpu.memory_space<vmem>>, %arg7: memref<256x128xbf16, #tpu.memory_space<vmem>>, %arg8: memref<256x128xf32, #tpu.memory_space<vmem>>) attributes {dimension_semantics = [#tpu.dimension_semantics<parallel>, #tpu.dimension_semantics<arbitrary>], iteration_bounds = array<i64: 1, 1>, scalar_prefetch = 0 : i64, scratch_operands = 1 : i64, tpu.core_type = #tpu.core_type<tc>, window_params = [{transform_indices = @transform_0, window_bounds = array<i64: 256, 256>}, {transform_indices = @transform_1, window_bounds = array<i64: 256, 128>}, {transform_indices = @transform_2, window_bounds = array<i64: 256, 1>}, {pipeline_mode = #tpu.pipeline_mode<synchronous>, transform_indices = @transform_3, window_bounds = array<i64: 128, 128>}, {pipeline_mode = #tpu.pipeline_mode<synchronous>, transform_indices = @transform_4, window_bounds = array<i64: 1, 128>}, {transform_indices = @transform_5, window_bounds = array<i64: 256, 128>}]} {
    %c0_i32 = arith.constant 0 : i32
    %0 = arith.cmpi eq, %arg1, %c0_i32 : i32
    %1 = arith.extui %0 : i1 to i32
    %c0_i32_0 = arith.constant 0 : i32
    %2 = arith.cmpi ne, %1, %c0_i32_0 : i32
    scf.if %2 {
      %cst_10 = arith.constant 0.000000e+00 : f32
      %12 = vector.broadcast %cst_10 : f32 to vector<256x128xf32>
      %c0_11 = arith.constant 0 : index
      %c0_12 = arith.constant 0 : index
      %13 = vector.load %arg8[%c0_11, %c0_12] : memref<256x128xf32, #tpu.memory_space<vmem>>, vector<256x128xf32>
      tpu.vector_store %arg8[%c0_11, %c0_12], %12 {strides = array<i32>} : memref<256x128xf32, #tpu.memory_space<vmem>>, vector<256x128xf32>,
    } else {
    }
    %c0 = arith.constant 0 : index
    %c0_1 = arith.constant 0 : index
    %3 = vector.load %arg8[%c0, %c0_1] : memref<256x128xf32, #tpu.memory_space<vmem>>, vector<256x128xf32>
    %c0_2 = arith.constant 0 : index
    %c0_3 = arith.constant 0 : index
    %4 = vector.load %arg2[%c0_2, %c0_3] : memref<256x256xbf16, #tpu.memory_space<vmem>>, vector<256x256xbf16>
    %c0_4 = arith.constant 0 : index
    %c0_5 = arith.constant 0 : index
    %5 = vector.load %arg3[%c0_4, %c0_5] : memref<256x128xbf16, #tpu.memory_space<vmem>>, vector<256x128xbf16>
    %cst = arith.constant dense<0.000000e+00> : vector<256x128xf32>
    %6 = tpu.matmul %4, %5, %cst {dimension_numbers = #tpu.dot_dimension_numbers<[1], [0], [0], [1], [0, 0, 1, 1], [], []>} : vector<256x256xbf16>, vector<256x128xbf16>, vector<256x128xf32> -> vector<256x128xf32>
    %7 = arith.addf %3, %6 : vector<256x128xf32>
    %c0_6 = arith.constant 0 : index
    %c0_7 = arith.constant 0 : index
    %8 = vector.load %arg8[%c0_6, %c0_7] : memref<256x128xf32, #tpu.memory_space<vmem>>, vector<256x128xf32>
    tpu.vector_store %arg8[%c0_6, %c0_7], %7 {strides = array<i32>} : memref<256x128xf32, #tpu.memory_space<vmem>>, vector<256x128xf32>,
    %c0_i32_8 = arith.constant 0 : i32
    %9 = arith.cmpi eq, %arg1, %c0_i32_8 : i32
    %10 = arith.extui %9 : i1 to i32
    %c0_i32_9 = arith.constant 0 : i32
    %11 = arith.cmpi ne, %10, %c0_i32_9 : i32
    scf.if %11 {
      %c0_10 = arith.constant 0 : index
      %c0_11 = arith.constant 0 : index
      %12 = vector.load %arg4[%c0_10, %c0_11] : memref<256x1xf32, #tpu.memory_space<vmem>>, vector<256x1xf32>
      %c0_12 = arith.constant 0 : index
      %c0_13 = arith.constant 0 : index
      %13 = vector.load %arg8[%c0_12, %c0_13] : memref<256x128xf32, #tpu.memory_space<vmem>>, vector<256x128xf32>
      %14 = vector.broadcast %12 : vector<256x1xf32> to vector<256x128xf32>
      %15 = arith.mulf %14, %13 : vector<256x128xf32>
      %c0_14 = arith.constant 0 : index
      %c0_15 = arith.constant 0 : index
      %16 = vector.load %arg5[%c0_14, %c0_15] : memref<128x128xf32, #tpu.memory_space<vmem>>, vector<128x128xf32>
      %cst_16 = arith.constant dense<0.000000e+00> : vector<256x128xf32>
      %17 = tpu.matmul %15, %16, %cst_16 {dimension_numbers = #tpu.dot_dimension_numbers<[1], [0], [0], [1], [0, 0, 1, 1], [], []>} : vector<256x128xf32>, vector<128x128xf32>, vector<256x128xf32> -> vector<256x128xf32>
      %c0_17 = arith.constant 0 : index
      %c0_18 = arith.constant 0 : index
      %18 = vector.load %arg6[%c0_17, %c0_18] : memref<1x128xf32, #tpu.memory_space<vmem>>, vector<1x128xf32>
      %19 = vector.broadcast %18 : vector<1x128xf32> to vector<256x128xf32>
      %20 = arith.addf %17, %19 : vector<256x128xf32>
      %cst_19 = arith.constant 0.000000e+00 : f32
      %21 = vector.broadcast %cst_19 : f32 to vector<256x128xf32>
      %22 = arith.maximumf %20, %21 : vector<256x128xf32>
      %c0_20 = arith.constant 0 : index
      %c0_21 = arith.constant 0 : index
      %23 = vector.load %arg4[%c0_20, %c0_21] : memref<256x1xf32, #tpu.memory_space<vmem>>, vector<256x1xf32>
      %24 = vector.broadcast %23 : vector<256x1xf32> to vector<256x128xf32>
      %25 = arith.mulf %24, %22 : vector<256x128xf32>
      %26 = arith.truncf %25 : vector<256x128xf32> to vector<256x128xbf16>
      %c0_22 = arith.constant 0 : index
      %c0_23 = arith.constant 0 : index
      %27 = vector.load %arg7[%c0_22, %c0_23] : memref<256x128xbf16, #tpu.memory_space<vmem>>, vector<256x128xbf16>
      tpu.vector_store %arg7[%c0_22, %c0_23], %26 {strides = array<i32>} : memref<256x128xbf16, #tpu.memory_space<vmem>>, vector<256x128xbf16>,
    } else {
    }
    return
  }
  func.func @transform_0(%arg0: i32, %arg1: i32) -> (i32, i32) {
    %c0_i32 = arith.constant 0 : i32
    return %arg0, %arg1 : i32, i32
  }
  func.func @transform_1(%arg0: i32, %arg1: i32) -> (i32, i32) {
    %c0_i32 = arith.constant 0 : i32
    %c0_i32_0 = arith.constant 0 : i32
    return %arg1, %c0_i32 : i32, i32
  }
  func.func @transform_2(%arg0: i32, %arg1: i32) -> (i32, i32) {
    %c0_i32 = arith.constant 0 : i32
    %c0_i32_0 = arith.constant 0 : i32
    return %arg0, %c0_i32 : i32, i32
  }
  func.func @transform_3(%arg0: i32, %arg1: i32) -> (i32, i32) {
    %c0_i32 = arith.constant 0 : i32
    %c0_i32_0 = arith.constant 0 : i32
    %c0_i32_1 = arith.constant 0 : i32
    return %c0_i32, %c0_i32_0 : i32, i32
  }
  func.func @transform_4(%arg0: i32, %arg1: i32) -> (i32, i32) {
    %c0_i32 = arith.constant 0 : i32
    %c0_i32_0 = arith.constant 0 : i32
    %c0_i32_1 = arith.constant 0 : i32
    return %c0_i32, %c0_i32_0 : i32, i32
  }
  func.func @transform_5(%arg0: i32, %arg1: i32) -> (i32, i32) {
    %c0_i32 = arith.constant 0 : i32
    %c0_i32_0 = arith.constant 0 : i32
    return %arg0, %c0_i32 : i32, i32
  }
}

</mosaic_0001>

<llo_original>
// kernel: tpu_custom_call.1
$region0: #{tpu_custom_call.1}
  #allocation0 [shape = 'u32[]', space=smem, size = 0x4, offset = 0x4, fixed_abs, tag = 'smem constant byte address 0x4 - core index']
  #allocation1 [shape = 'u32[144,128]{1,0:T(1,128)}', space=vmem, size = 0x12000, scoped, tag = 'internal scratch']
  #allocation2 [shape = 'f32[256,128]{1,0:T(8,128)}', space=vmem, size = 0x20000, scoped, tag = 'scratch operand']
  %s0 = inlined_call_operand.vmem [shape: bf16[256,256], index: 0, kind: input, shape index: {}]
  %s1 = inlined_call_operand.hbm [shape: bf16[256,128], index: 1, kind: input, shape index: {}]
  %s2 = inlined_call_operand.vmem [shape: f32[256,1], index: 2, kind: input, shape index: {}]
  %s3 = inlined_call_operand.hbm [shape: f32[128,128], index: 3, kind: input, shape index: {}]
  %s4 = inlined_call_operand.vmem [shape: f32[1,128], index: 4, kind: input, shape index: {}]
  %s5 = inlined_call_operand.hbm [shape: bf16[256,128], index: 5, kind: output, shape index: {}]
  %s6 = sld [smem:[#allocation0]]
  $region46: #{tpu_custom_call.1} parent=0
    _
  %s8 = ssub.s32 1, %s6
  %s9 = scalar_select 0, %s8, %s6
  $region1: #{tpu_custom_call.1} parent=0
    #allocation3 [shape = 'u8[65536]{0}', space=vmem, size = 0x10000, scoped, tag = 'input window, operand 1, single buffered']
    #allocation4 [shape = 's32[1]{0}', space=sflag, size = 0x4, scoped, tag = 'scoped memory for tpu_custom_call.1']
    #allocation5 [shape = 's32[1]{0}', space=sflag, size = 0x4, scoped, tag = 'scoped memory for tpu_custom_call.1']
    #allocation6 [shape = 'u8[65536]{0}', space=vmem, size = 0x10000, scoped, tag = 'input window, operand 3, single buffered']
    #allocation7 [shape = 's32[1]{0}', space=sflag, size = 0x4, scoped, tag = 'scoped memory for tpu_custom_call.1']
    #allocation8 [shape = 'u8[65536]{0}', space=vmem, size = 0x10000, scoped, tag = 'output window, operand 0, single buffered']
    %10 = vsyncpa [#allocation4], 0
    %11 = vsyncpa [#allocation7], 0
    %12 = vsyncpa [#allocation5], 0
    // Predicated region
    $region2: #{tpu_custom_call.1} parent=1 // pred_check
      _
    $region3: #{tpu_custom_call.1} parent=1 // pred_check_branch
      %14 = sbr.rel (0) target = $region5
    $region4: #{tpu_custom_call.1} parent=1 // pred_region
      _
    $region5: #{tpu_custom_call.1} parent=1 // pred_fallthru
      _
    // Predicated region
    $region6: #{tpu_custom_call.1} parent=1 // pred_check
      _
    $region7: #{tpu_custom_call.1} parent=1 // pred_check_branch
      %16 = sbr.rel (0) target = $region9
    $region8: #{tpu_custom_call.1} parent=1 // pred_region
      %s18 = ssub.s32 2048, 2048
      %19 = vsyncadd [#allocation4], %s18
      %s20 = sshll.u32 [#allocation3], 4
      %s21 = int_to_ptr.vmem [resolvable:$true] %s20
      %26 = dma.hbm_to_vmem [thread:$0]  %s1, 2048, %s21, [#allocation4], 64, 64, 4
    $region9: #{tpu_custom_call.1} parent=1 // pred_fallthru
      _
    // Predicated region
    $region10: #{tpu_custom_call.1} parent=1 // pred_check
      _
    $region11: #{tpu_custom_call.1} parent=1 // pred_check_branch
      %28 = sbr.rel (0) target = $region13
    $region12: #{tpu_custom_call.1} parent=1 // pred_region
      _
    $region13: #{tpu_custom_call.1} parent=1 // pred_fallthru
      _
    // Predicated region
    $region14: #{tpu_custom_call.1} parent=1 // pred_check
      _
    $region15: #{tpu_custom_call.1} parent=1 // pred_check_branch
      %30 = sbr.rel (0) target = $region17
    $region16: #{tpu_custom_call.1} parent=1 // pred_region
      %s32 = ssub.s32 2048, 2048
      %33 = vsyncadd [#allocation7], %s32
      %s34 = sshll.u32 [#allocation6], 4
      %s35 = int_to_ptr.vmem [resolvable:$true] %s34
      %40 = dma.hbm_to_vmem [thread:$0]  %s3, 2048, %s35, [#allocation7], 128, 128, 8
    $region17: #{tpu_custom_call.1} parent=1 // pred_fallthru
      _
    // Predicated region
    $region18: #{tpu_custom_call.1} parent=1 // pred_check
      _
    $region19: #{tpu_custom_call.1} parent=1 // pred_check_branch
      %42 = sbr.rel (0) target = $region21
    $region20: #{tpu_custom_call.1} parent=1 // pred_region
      _
    $region21: #{tpu_custom_call.1} parent=1 // pred_fallthru
      _
    // Predicated region
    $region22: #{tpu_custom_call.1} parent=1 // pred_check
      _
    $region23: #{tpu_custom_call.1} parent=1 // pred_check_branch
      %44 = sbr.rel (0) target = $region25
    $region24: #{tpu_custom_call.1} parent=1 // pred_region
      %45 = dma.done [#allocation4], 2048
    $region25: #{tpu_custom_call.1} parent=1 // pred_fallthru
      _
    // Predicated region
    $region26: #{tpu_custom_call.1} parent=1 // pred_check
      _
    $region27: #{tpu_custom_call.1} parent=1 // pred_check_branch
      %47 = sbr.rel (0) target = $region29
    $region28: #{tpu_custom_call.1} parent=1 // pred_region
      %48 = dma.done [#allocation7], 2048
    $region29: #{tpu_custom_call.1} parent=1 // pred_fallthru
      _
    %p50 = scmp.eq.s32.totalorder 0, 0
    // Predicated region
    $region30: #{tpu_custom_call.1} parent=1 // pred_check
      %p51 = pneg %p50
    $region31: #{tpu_custom_call.1} parent=1 // pred_check_branch
      %53 = sbr.rel (%p51) target = $region33
    $region32: #{tpu_custom_call.1} parent=1 // pred_region
      %54 = vst [vmem:[#allocation2] sm:$0xff] 0.0
      %55 = vst [vmem:[#allocation2 + $0x8] sm:$0xff] 0.0
      %56 = vst [vmem:[#allocation2 + $0x10] sm:$0xff] 0.0
      %57 = vst [vmem:[#allocation2 + $0x18] sm:$0xff] 0.0
      %58 = vst [vmem:[#allocation2 + $0x20] sm:$0xff] 0.0
      %59 = vst [vmem:[#allocation2 + $0x28] sm:$0xff] 0.0
      %60 = vst [vmem:[#allocation2 + $0x30] sm:$0xff] 0.0
      %61 = vst [vmem:[#allocation2 + $0x38] sm:$0xff] 0.0
      %62 = vst [vmem:[#allocation2 + $0x40] sm:$0xff] 0.0
      %63 = vst [vmem:[#allocation2 + $0x48] sm:$0xff] 0.0
      %64 = vst [vmem:[#allocation2 + $0x50] sm:$0xff] 0.0
      %65 = vst [vmem:[#allocation2 + $0x58] sm:$0xff] 0.0
      %66 = vst [vmem:[#allocation2 + $0x60] sm:$0xff] 0.0
      %67 = vst [vmem:[#allocation2 + $0x68] sm:$0xff] 0.0
      %68 = vst [vmem:[#allocation2 + $0x70] sm:$0xff] 0.0
      %69 = vst [vmem:[#allocation2 + $0x78] sm:$0xff] 0.0
      %70 = vst [vmem:[#allocation2 + $0x80] sm:$0xff] 0.0
      %71 = vst [vmem:[#allocation2 + $0x88] sm:$0xff] 0.0
      %72 = vst [vmem:[#allocation2 + $0x90] sm:$0xff] 0.0
      %73 = vst [vmem:[#allocation2 + $0x98] sm:$0xff] 0.0
      %74 = vst [vmem:[#allocation2 + $0xa0] sm:$0xff] 0.0
      %75 = vst [vmem:[#allocation2 + $0xa8] sm:$0xff] 0.0
      %76 = vst [vmem:[#allocation2 + $0xb0] sm:$0xff] 0.0
      %77 = vst [vmem:[#allocation2 + $0xb8] sm:$0xff] 0.0
      %78 = vst [vmem:[#allocation2 + $0xc0] sm:$0xff] 0.0
      %79 = vst [vmem:[#allocation2 + $0xc8] sm:$0xff] 0.0
      %80 = vst [vmem:[#allocation2 + $0xd0] sm:$0xff] 0.0
      %81 = vst [vmem:[#allocation2 + $0xd8] sm:$0xff] 0.0
      %82 = vst [vmem:[#allocation2 + $0xe0] sm:$0xff] 0.0
      %83 = vst [vmem:[#allocation2 + $0xe8] sm:$0xff] 0.0
      %84 = vst [vmem:[#allocation2 + $0xf0] sm:$0xff] 0.0
      %85 = vst [vmem:[#allocation2 + $0xf8] sm:$0xff] 0.0
    $region33: #{tpu_custom_call.1} parent=1 // pred_fallthru
      _
    %v86 = vld [vmem:[#allocation2] sm:$0xff]
    %v87 = vld [vmem:[#allocation2 + $0x8] sm:$0xff]
    %v88 = vld [vmem:[#allocation2 + $0x10] sm:$0xff]
    %v89 = vld [vmem:[#allocation2 + $0x18] sm:$0xff]
    %v90 = vld [vmem:[#allocation2 + $0x20] sm:$0xff]
    %v91 = vld [vmem:[#allocation2 + $0x28] sm:$0xff]
    %v92 = vld [vmem:[#allocation2 + $0x30] sm:$0xff]
    %v93 = vld [vmem:[#allocation2 + $0x38] sm:$0xff]
    %v94 = vld [vmem:[#allocation2 + $0x40] sm:$0xff]
    %v95 = vld [vmem:[#allocation2 + $0x48] sm:$0xff]
    %v96 = vld [vmem:[#allocation2 + $0x50] sm:$0xff]
    %v97 = vld [vmem:[#allocation2 + $0x58] sm:$0xff]
    %v98 = vld [vmem:[#allocation2 + $0x60] sm:$0xff]
    %v99 = vld [vmem:[#allocation2 + $0x68] sm:$0xff]
    %v100 = vld [vmem:[#allocation2 + $0x70] sm:$0xff]
    %v101 = vld [vmem:[#allocation2 + $0x78] sm:$0xff]
    %v102 = vld [vmem:[#allocation2 + $0x80] sm:$0xff]
    %v103 = vld [vmem:[#allocation2 + $0x88] sm:$0xff]
    %v104 = vld [vmem:[#allocation2 + $0x90] sm:$0xff]
    %v105 = vld [vmem:[#allocation2 + $0x98] sm:$0xff]
    %v106 = vld [vmem:[#allocation2 + $0xa0] sm:$0xff]
    %v107 = vld [vmem:[#allocation2 + $0xa8] sm:$0xff]
    %v108 = vld [vmem:[#allocation2 + $0xb0] sm:$0xff]
    %v109 = vld [vmem:[#allocation2 + $0xb8] sm:$0xff]
    %v110 = vld [vmem:[#allocation2 + $0xc0] sm:$0xff]
    %v111 = vld [vmem:[#allocation2 + $0xc8] sm:$0xff]
    %v112 = vld [vmem:[#allocation2 + $0xd0] sm:$0xff]
    %v113 = vld [vmem:[#allocation2 + $0xd8] sm:$0xff]
    %v114 = vld [vmem:[#allocation2 + $0xe0] sm:$0xff]
    %v115 = vld [vmem:[#allocation2 + $0xe8] sm:$0xff]
    %v116 = vld [vmem:[#allocation2 + $0xf0] sm:$0xff]
    %v117 = vld [vmem:[#allocation2 + $0xf8] sm:$0xff]
    %v118 = vld [vmem:[%s0] sm:$0xff]
    %v119 = vld [vmem:[%s0 + $0x8] sm:$0xff]
    %v120 = vld [vmem:[%s0 + $0x10] sm:$0xff]
    %v121 = vld [vmem:[%s0 + $0x18] sm:$0xff]
    %v122 = vld [vmem:[%s0 + $0x20] sm:$0xff]
    %v123 = vld [vmem:[%s0 + $0x28] sm:$0xff]
    %v124 = vld [vmem:[%s0 + $0x30] sm:$0xff]
    %v125 = vld [vmem:[%s0 + $0x38] sm:$0xff]
    %v126 = vld [vmem:[%s0 + $0x40] sm:$0xff]
    %v127 = vld [vmem:[%s0 + $0x48] sm:$0xff]
    %v128 = vld [vmem:[%s0 + $0x50] sm:$0xff]
    %v129 = vld [vmem:[%s0 + $0x58] sm:$0xff]
    %v130 = vld [vmem:[%s0 + $0x60] sm:$0xff]
    %v131 = vld [vmem:[%s0 + $0x68] sm:$0xff]
    %v132 = vld [vmem:[%s0 + $0x70] sm:$0xff]
    %v133 = vld [vmem:[%s0 + $0x78] sm:$0xff]
    %v134 = vld [vmem:[%s0 + $0x80] sm:$0xff]
    %v135 = vld [vmem:[%s0 + $0x88] sm:$0xff]
    %v136 = vld [vmem:[%s0 + $0x90] sm:$0xff]
    %v137 = vld [vmem:[%s0 + $0x98] sm:$0xff]
    %v138 = vld [vmem:[%s0 + $0xa0] sm:$0xff]
    %v139 = vld [vmem:[%s0 + $0xa8] sm:$0xff]
    %v140 = vld [vmem:[%s0 + $0xb0] sm:$0xff]
    %v141 = vld [vmem:[%s0 + $0xb8] sm:$0xff]
    %v142 = vld [vmem:[%s0 + $0xc0] sm:$0xff]
    %v143 = vld [vmem:[%s0 + $0xc8] sm:$0xff]
    %v144 = vld [vmem:[%s0 + $0xd0] sm:$0xff]
    %v145 = vld [vmem:[%s0 + $0xd8] sm:$0xff]
    %v146 = vld [vmem:[%s0 + $0xe0] sm:$0xff]
    %v147 = vld [vmem:[%s0 + $0xe8] sm:$0xff]
    %v148 = vld [vmem:[%s0 + $0xf0] sm:$0xff]
    %v149 = vld [vmem:[%s0 + $0xf8] sm:$0xff]
    %v150 = vld [vmem:[#allocation3] sm:$0xf]
    %v151 = vld [vmem:[#allocation3 + $0x4] sm:$0xf]
    %v152 = vld [vmem:[#allocation3 + $0x8] sm:$0xf]
    %v153 = vld [vmem:[#allocation3 + $0xc] sm:$0xf]
    %v154 = vld [vmem:[#allocation3 + $0x10] sm:$0xf]
    %v155 = vld [vmem:[#allocation3 + $0x14] sm:$0xf]
    %v156 = vld [vmem:[#allocation3 + $0x18] sm:$0xf]
    %v157 = vld [vmem:[#allocation3 + $0x1c] sm:$0xf]
    %v158 = vld [vmem:[#allocation3 + $0x20] sm:$0xf]
    %v159 = vld [vmem:[#allocation3 + $0x24] sm:$0xf]
    %v160 = vld [vmem:[#allocation3 + $0x28] sm:$0xf]
    %v161 = vld [vmem:[#allocation3 + $0x2c] sm:$0xf]
    %v162 = vld [vmem:[#allocation3 + $0x30] sm:$0xf]
    %v163 = vld [vmem:[#allocation3 + $0x34] sm:$0xf]
    %v164 = vld [vmem:[#allocation3 + $0x38] sm:$0xf]
    %v165 = vld [vmem:[#allocation3 + $0x3c] sm:$0xf]
    %v166 = vld [vmem:[#allocation3 + $0x40] sm:$0xf]
    %v167 = vld [vmem:[#allocation3 + $0x44] sm:$0xf]
    %v168 = vld [vmem:[#allocation3 + $0x48] sm:$0xf]
    %v169 = vld [vmem:[#allocation3 + $0x4c] sm:$0xf]
    %v170 = vld [vmem:[#allocation3 + $0x50] sm:$0xf]
    %v171 = vld [vmem:[#allocation3 + $0x54] sm:$0xf]
    %v172 = vld [vmem:[#allocation3 + $0x58] sm:$0xf]
    %v173 = vld [vmem:[#allocation3 + $0x5c] sm:$0xf]
    %v174 = vld [vmem:[#allocation3 + $0x60] sm:$0xf]
    %v175 = vld [vmem:[#allocation3 + $0x64] sm:$0xf]
    %v176 = vld [vmem:[#allocation3 + $0x68] sm:$0xf]
    %v177 = vld [vmem:[#allocation3 + $0x6c] sm:$0xf]
    %v178 = vld [vmem:[#allocation3 + $0x70] sm:$0xf]
    %v179 = vld [vmem:[#allocation3 + $0x74] sm:$0xf]
    %v180 = vld [vmem:[#allocation3 + $0x78] sm:$0xf]
    %v181 = vld [vmem:[#allocation3 + $0x7c] sm:$0xf]
    %v214 = vunpack.c.l.b16 %v118
    %v215 = vunpack.c.h.b16 %v118
    %v216 = vunpack.c.l.b16 %v119
    %v217 = vunpack.c.h.b16 %v119
    %v218 = vunpack.c.l.b16 %v120
    %v219 = vunpack.c.h.b16 %v120
    %v220 = vunpack.c.l.b16 %v121
    %v221 = vunpack.c.h.b16 %v121
    %v222 = vunpack.c.l.b16 %v122
    %v223 = vunpack.c.h.b16 %v122
    %v224 = vunpack.c.l.b16 %v123
    %v225 = vunpack.c.h.b16 %v123
    %v226 = vunpack.c.l.b16 %v124
    %v227 = vunpack.c.h.b16 %v124
    %v228 = vunpack.c.l.b16 %v125
    %v229 = vunpack.c.h.b16 %v125
    %v230 = vunpack.c.l.b16 %v126
    %v231 = vunpack.c.h.b16 %v126
    %v232 = vunpack.c.l.b16 %v127
    %v233 = vunpack.c.h.b16 %v127
    %v234 = vunpack.c.l.b16 %v128
    %v235 = vunpack.c.h.b16 %v128
    %v236 = vunpack.c.l.b16 %v129
    %v237 = vunpack.c.h.b16 %v129
    %v238 = vunpack.c.l.b16 %v130
    %v239 = vunpack.c.h.b16 %v130
    %v240 = vunpack.c.l.b16 %v131
    %v241 = vunpack.c.h.b16 %v131
    %v242 = vunpack.c.l.b16 %v132
    %v243 = vunpack.c.h.b16 %v132
    %v244 = vunpack.c.l.b16 %v133
    %v245 = vunpack.c.h.b16 %v133
    %v246 = vunpack.c.l.b16 %v134
    %v247 = vunpack.c.h.b16 %v134
    %v248 = vunpack.c.l.b16 %v135
    %v249 = vunpack.c.h.b16 %v135
    %v250 = vunpack.c.l.b16 %v136
    %v251 = vunpack.c.h.b16 %v136
    %v252 = vunpack.c.l.b16 %v137
    %v253 = vunpack.c.h.b16 %v137
    %v254 = vunpack.c.l.b16 %v138
    %v255 = vunpack.c.h.b16 %v138
    %v256 = vunpack.c.l.b16 %v139
    %v257 = vunpack.c.h.b16 %v139
    %v258 = vunpack.c.l.b16 %v140
    %v259 = vunpack.c.h.b16 %v140
    %v260 = vunpack.c.l.b16 %v141
    %v261 = vunpack.c.h.b16 %v141
    %v262 = vunpack.c.l.b16 %v142
    %v263 = vunpack.c.h.b16 %v142
    %v264 = vunpack.c.l.b16 %v143
    %v265 = vunpack.c.h.b16 %v143
    %v266 = vunpack.c.l.b16 %v144
    %v267 = vunpack.c.h.b16 %v144
    %v268 = vunpack.c.l.b16 %v145
    %v269 = vunpack.c.h.b16 %v145
    %v270 = vunpack.c.l.b16 %v146
    %v271 = vunpack.c.h.b16 %v146
    %v272 = vunpack.c.l.b16 %v147
    %v273 = vunpack.c.h.b16 %v147
    %v274 = vunpack.c.l.b16 %v148
    %v275 = vunpack.c.h.b16 %v148
    %v276 = vunpack.c.l.b16 %v149
    %v277 = vunpack.c.h.b16 %v149
    %v278 = vpack.c.b16 %v216, %v214
    %v279 = vpack.c.b16 %v217, %v215
    %v280 = vpack.c.b16 %v220, %v218
    %v281 = vpack.c.b16 %v221, %v219
    %v282 = vpack.c.b16 %v224, %v222
    %v283 = vpack.c.b16 %v225, %v223
    %v284 = vpack.c.b16 %v228, %v226
    %v285 = vpack.c.b16 %v229, %v227
    %v286 = vpack.c.b16 %v232, %v230
    %v287 = vpack.c.b16 %v233, %v231
    %v288 = vpack.c.b16 %v236, %v234
    %v289 = vpack.c.b16 %v237, %v235
    %v290 = vpack.c.b16 %v240, %v238
    %v291 = vpack.c.b16 %v241, %v239
    %v292 = vpack.c.b16 %v244, %v242
    %v293 = vpack.c.b16 %v245, %v243
    %v294 = vpack.c.b16 %v248, %v246
    %v295 = vpack.c.b16 %v249, %v247
    %v296 = vpack.c.b16 %v252, %v250
    %v297 = vpack.c.b16 %v253, %v251
    %v298 = vpack.c.b16 %v256, %v254
    %v299 = vpack.c.b16 %v257, %v255
    %v300 = vpack.c.b16 %v260, %v258
    %v301 = vpack.c.b16 %v261, %v259
    %v302 = vpack.c.b16 %v264, %v262
    %v303 = vpack.c.b16 %v265, %v263
    %v304 = vpack.c.b16 %v268, %v266
    %v305 = vpack.c.b16 %v269, %v267
    %v306 = vpack.c.b16 %v272, %v270
    %v307 = vpack.c.b16 %v273, %v271
    %v308 = vpack.c.b16 %v276, %v274
    %v309 = vpack.c.b16 %v277, %v275
    %v374 = vunpack.c.l.b16 %v150
    %v375 = vunpack.c.l.b16 %v151
    %v376 = vunpack.c.l.b16 %v152
    %v377 = vunpack.c.l.b16 %v153
    %v378 = vunpack.c.l.b16 %v154
    %v379 = vunpack.c.l.b16 %v155
    %v380 = vunpack.c.l.b16 %v156
    %v381 = vunpack.c.l.b16 %v157
    %v382 = vunpack.c.l.b16 %v158
    %v383 = vunpack.c.l.b16 %v159
    %v384 = vunpack.c.l.b16 %v160
    %v385 = vunpack.c.l.b16 %v161
    %v386 = vunpack.c.l.b16 %v162
    %v387 = vunpack.c.l.b16 %v163
    %v388 = vunpack.c.l.b16 %v164
    %v389 = vunpack.c.l.b16 %v165
    %v390 = vunpack.c.l.b16 %v166
    %v391 = vunpack.c.l.b16 %v167
    %v392 = vunpack.c.l.b16 %v168
    %v393 = vunpack.c.l.b16 %v169
    %v394 = vunpack.c.l.b16 %v170
    %v395 = vunpack.c.l.b16 %v171
    %v396 = vunpack.c.l.b16 %v172
    %v397 = vunpack.c.l.b16 %v173
    %v398 = vunpack.c.l.b16 %v174
    %v399 = vunpack.c.l.b16 %v175
    %v400 = vunpack.c.l.b16 %v176
    %v401 = vunpack.c.l.b16 %v177
    %v402 = vunpack.c.l.b16 %v178
    %v403 = vunpack.c.l.b16 %v179
    %v404 = vunpack.c.l.b16 %v180
    %v405 = vunpack.c.l.b16 %v181
    %v406 = vpack.c.b16 %v375, %v374
    %v407 = vpack.c.b16 %v377, %v376
    %v408 = vpack.c.b16 %v379, %v378
    %v409 = vpack.c.b16 %v381, %v380
    %v410 = vpack.c.b16 %v383, %v382
    %v411 = vpack.c.b16 %v385, %v384
    %v412 = vpack.c.b16 %v387, %v386
    %v413 = vpack.c.b16 %v389, %v388
    %v414 = vpack.c.b16 %v391, %v390
    %v415 = vpack.c.b16 %v393, %v392
    %v416 = vpack.c.b16 %v395, %v394
    %v417 = vpack.c.b16 %v397, %v396
    %v418 = vpack.c.b16 %v399, %v398
    %v419 = vpack.c.b16 %v401, %v400
    %v420 = vpack.c.b16 %v403, %v402
    %v421 = vpack.c.b16 %v405, %v404
    %438 = vmatprep.subr.bf16.mxu0 0
    %439 = vmatpush1.bf16.msra.mxu0 %v413
    %440 = vmatprep.subr.bf16.mxu0 0
    %441 = vmatpush1.bf16.msra.mxu0 %v412
    %442 = vmatprep.subr.bf16.mxu0 0
    %443 = vmatpush1.bf16.msra.mxu0 %v411
    %444 = vmatprep.subr.bf16.mxu0 0
    %445 = vmatpush1.bf16.msra.mxu0 %v410
    %446 = vmatprep.subr.bf16.mxu0 0
    %447 = vmatpush1.bf16.msra.mxu0 %v409
    %448 = vmatprep.subr.bf16.mxu0 0
    %449 = vmatpush1.bf16.msra.mxu0 %v408
    %450 = vmatprep.subr.bf16.mxu0 0
    %451 = vmatpush1.bf16.msra.mxu0 %v407
    %452 = vmatprep.subr.bf16.mxu0 0
    %453 = vmatpush1.bf16.msra.mxu0 %v406
    %454 = vmatprep.subr.bf16.mxu0 0
    %455 = vmatpush2.bf16.msra.mxu0 %v421
    %456 = vmatprep.subr.bf16.mxu0 0
    %457 = vmatpush2.bf16.msra.mxu0 %v420
    %458 = vmatprep.subr.bf16.mxu0 0
    %459 = vmatpush2.bf16.msra.mxu0 %v419
    %460 = vmatprep.subr.bf16.mxu0 0
    %461 = vmatpush2.bf16.msra.mxu0 %v418
    %462 = vmatprep.subr.bf16.mxu0 0
    %463 = vmatpush2.bf16.msra.mxu0 %v417
    %464 = vmatprep.subr.bf16.mxu0 0
    %465 = vmatpush2.bf16.msra.mxu0 %v416
    %466 = vmatprep.subr.bf16.mxu0 0
    %467 = vmatpush2.bf16.msra.mxu0 %v415
    %468 = vmatprep.subr.bf16.mxu0 0
    %469 = vmatpush2.bf16.msra.mxu0 %v414
    %470 = vmatprep.mubr.bf16.mxu0 %v279
    %471 = vmatmul.mubr.bf16.gmra.mxu0 %v278
    %v472 = vpop.f32.mrf.mxu0
    %v473 = vadd.f32 0.0, %v472
    %v474 = vpop.f32.mrf.mxu0
    %v475 = vpop.f32.mrf.mxu0
    %v476 = vadd.f32 0.0, %v475
    %v477 = vpop.f32.mrf.mxu0
    %478 = vmatprep.mubr.bf16.mxu0 %v281
    %479 = vmatmul.mubr.bf16.gmra.mxu0 %v280
    %v480 = vpop.f32.mrf.mxu0
    %v481 = vadd.f32 0.0, %v480
    %v482 = vpop.f32.mrf.mxu0
    %v483 = vpop.f32.mrf.mxu0
    %v484 = vadd.f32 0.0, %v483
    %v485 = vpop.f32.mrf.mxu0
    %486 = vmatprep.mubr.bf16.mxu0 %v283
    %487 = vmatmul.mubr.bf16.gmra.mxu0 %v282
    %v488 = vpop.f32.mrf.mxu0
    %v489 = vadd.f32 0.0, %v488
    %v490 = vpop.f32.mrf.mxu0
    %v491 = vpop.f32.mrf.mxu0
    %v492 = vadd.f32 0.0, %v491
    %v493 = vpop.f32.mrf.mxu0
    %494 = vmatprep.mubr.bf16.mxu0 %v285
    %495 = vmatmul.mubr.bf16.gmra.mxu0 %v284
    %v496 = vpop.f32.mrf.mxu0
    %v497 = vadd.f32 0.0, %v496
    %v498 = vpop.f32.mrf.mxu0
    %v499 = vpop.f32.mrf.mxu0
    %v500 = vadd.f32 0.0, %v499
    %v501 = vpop.f32.mrf.mxu0
    %502 = vmatprep.mubr.bf16.mxu0 %v287
    %503 = vmatmul.mubr.bf16.gmra.mxu0 %v286
    %v504 = vpop.f32.mrf.mxu0
    %v505 = vadd.f32 0.0, %v504
    %v506 = vpop.f32.mrf.mxu0
    %v507 = vpop.f32.mrf.mxu0
    %v508 = vadd.f32 0.0, %v507
    %v509 = vpop.f32.mrf.mxu0
    %510 = vmatprep.mubr.bf16.mxu0 %v289
    %511 = vmatmul.mubr.bf16.gmra.mxu0 %v288
    %v512 = vpop.f32.mrf.mxu0
    %v513 = vadd.f32 0.0, %v512
    %v514 = vpop.f32.mrf.mxu0
    %v515 = vpop.f32.mrf.mxu0
    %v516 = vadd.f32 0.0, %v515
    %v517 = vpop.f32.mrf.mxu0
    %518 = vmatprep.mubr.bf16.mxu0 %v291
    %519 = vmatmul.mubr.bf16.gmra.mxu0 %v290
    %v520 = vpop.f32.mrf.mxu0
    %v521 = vadd.f32 0.0, %v520
    %v522 = vpop.f32.mrf.mxu0
    %v523 = vpop.f32.mrf.mxu0
    %v524 = vadd.f32 0.0, %v523
    %v525 = vpop.f32.mrf.mxu0
    %526 = vmatprep.mubr.bf16.mxu0 %v293
    %527 = vmatmul.mubr.bf16.gmra.mxu0 %v292
    %v528 = vpop.f32.mrf.mxu0
    %v529 = vadd.f32 0.0, %v528
    %v530 = vpop.f32.mrf.mxu0
    %v531 = vpop.f32.mrf.mxu0
    %v532 = vadd.f32 0.0, %v531
    %v533 = vpop.f32.mrf.mxu0
    %534 = vmatprep.mubr.bf16.mxu0 %v295
    %535 = vmatmul.mubr.bf16.gmra.mxu0 %v294
    %v536 = vpop.f32.mrf.mxu0
    %v537 = vadd.f32 0.0, %v536
    %v538 = vpop.f32.mrf.mxu0
    %v539 = vpop.f32.mrf.mxu0
    %v540 = vadd.f32 0.0, %v539
    %v541 = vpop.f32.mrf.mxu0
    %542 = vmatprep.mubr.bf16.mxu0 %v297
    %543 = vmatmul.mubr.bf16.gmra.mxu0 %v296
    %v544 = vpop.f32.mrf.mxu0
    %v545 = vadd.f32 0.0, %v544
    %v546 = vpop.f32.mrf.mxu0
    %v547 = vpop.f32.mrf.mxu0
    %v548 = vadd.f32 0.0, %v547
    %v549 = vpop.f32.mrf.mxu0
    %550 = vmatprep.mubr.bf16.mxu0 %v299
    %551 = vmatmul.mubr.bf16.gmra.mxu0 %v298
    %v552 = vpop.f32.mrf.mxu0
    %v553 = vadd.f32 0.0, %v552
    %v554 = vpop.f32.mrf.mxu0
    %v555 = vpop.f32.mrf.mxu0
    %v556 = vadd.f32 0.0, %v555
    %v557 = vpop.f32.mrf.mxu0
    %558 = vmatprep.mubr.bf16.mxu0 %v301
    %559 = vmatmul.mubr.bf16.gmra.mxu0 %v300
    %v560 = vpop.f32.mrf.mxu0
    %v561 = vadd.f32 0.0, %v560
    %v562 = vpop.f32.mrf.mxu0
    %v563 = vpop.f32.mrf.mxu0
    %v564 = vadd.f32 0.0, %v563
    %v565 = vpop.f32.mrf.mxu0
    %566 = vmatprep.mubr.bf16.mxu0 %v303
    %567 = vmatmul.mubr.bf16.gmra.mxu0 %v302
    %v568 = vpop.f32.mrf.mxu0
    %v569 = vadd.f32 0.0, %v568
    %v570 = vpop.f32.mrf.mxu0
    %v571 = vpop.f32.mrf.mxu0
    %v572 = vadd.f32 0.0, %v571
    %v573 = vpop.f32.mrf.mxu0
    %574 = vmatprep.mubr.bf16.mxu0 %v305
    %575 = vmatmul.mubr.bf16.gmra.mxu0 %v304
    %v576 = vpop.f32.mrf.mxu0
    %v577 = vadd.f32 0.0, %v576
    %v578 = vpop.f32.mrf.mxu0
    %v579 = vpop.f32.mrf.mxu0
    %v580 = vadd.f32 0.0, %v579
    %v581 = vpop.f32.mrf.mxu0
    %582 = vmatprep.mubr.bf16.mxu0 %v307
    %583 = vmatmul.mubr.bf16.gmra.mxu0 %v306
    %v584 = vpop.f32.mrf.mxu0
    %v585 = vadd.f32 0.0, %v584
    %v586 = vpop.f32.mrf.mxu0
    %v587 = vpop.f32.mrf.mxu0
    %v588 = vadd.f32 0.0, %v587
    %v589 = vpop.f32.mrf.mxu0
    %590 = vmatprep.mubr.bf16.mxu0 %v309
    %591 = vmatmul.mubr.bf16.gmra.mxu0 %v308
    %v592 = vpop.f32.mrf.mxu0
    %v593 = vadd.f32 0.0, %v592
    %v594 = vpop.f32.mrf.mxu0
    %v595 = vpop.f32.mrf.mxu0
    %v596 = vadd.f32 0.0, %v595
    %v597 = vpop.f32.mrf.mxu0
    %598 = vdwg.mxu0
    %v599 = vadd.f32 %v86, %v473
    %v600 = vadd.f32 %v87, %v476
    %v601 = vadd.f32 %v88, %v481
    %v602 = vadd.f32 %v89, %v484
    %v603 = vadd.f32 %v90, %v489
    %v604 = vadd.f32 %v91, %v492
    %v605 = vadd.f32 %v92, %v497
    %v606 = vadd.f32 %v93, %v500
    %v607 = vadd.f32 %v94, %v505
    %v608 = vadd.f32 %v95, %v508
    %v609 = vadd.f32 %v96, %v513
    %v610 = vadd.f32 %v97, %v516
    %v611 = vadd.f32 %v98, %v521
    %v612 = vadd.f32 %v99, %v524
    %v613 = vadd.f32 %v100, %v529
    %v614 = vadd.f32 %v101, %v532
    %v615 = vadd.f32 %v102, %v537
    %v616 = vadd.f32 %v103, %v540
    %v617 = vadd.f32 %v104, %v545
    %v618 = vadd.f32 %v105, %v548
    %v619 = vadd.f32 %v106, %v553
    %v620 = vadd.f32 %v107, %v556
    %v621 = vadd.f32 %v108, %v561
    %v622 = vadd.f32 %v109, %v564
    %v623 = vadd.f32 %v110, %v569
    %v624 = vadd.f32 %v111, %v572
    %v625 = vadd.f32 %v112, %v577
    %v626 = vadd.f32 %v113, %v580
    %v627 = vadd.f32 %v114, %v585
    %v628 = vadd.f32 %v115, %v588
    %v629 = vadd.f32 %v116, %v593
    %v630 = vadd.f32 %v117, %v596
    %631 = vst [vmem:[#allocation2] sm:$0xff] %v599
    %632 = vst [vmem:[#allocation2 + $0x8] sm:$0xff] %v600
    %633 = vst [vmem:[#allocation2 + $0x10] sm:$0xff] %v601
    %634 = vst [vmem:[#allocation2 + $0x18] sm:$0xff] %v602
    %635 = vst [vmem:[#allocation2 + $0x20] sm:$0xff] %v603
    %636 = vst [vmem:[#allocation2 + $0x28] sm:$0xff] %v604
    %637 = vst [vmem:[#allocation2 + $0x30] sm:$0xff] %v605
    %638 = vst [vmem:[#allocation2 + $0x38] sm:$0xff] %v606
    %639 = vst [vmem:[#allocation2 + $0x40] sm:$0xff] %v607
    %640 = vst [vmem:[#allocation2 + $0x48] sm:$0xff] %v608
    %641 = vst [vmem:[#allocation2 + $0x50] sm:$0xff] %v609
    %642 = vst [vmem:[#allocation2 + $0x58] sm:$0xff] %v610
    %643 = vst [vmem:[#allocation2 + $0x60] sm:$0xff] %v611
    %644 = vst [vmem:[#allocation2 + $0x68] sm:$0xff] %v612
    %645 = vst [vmem:[#allocation2 + $0x70] sm:$0xff] %v613
    %646 = vst [vmem:[#allocation2 + $0x78] sm:$0xff] %v614
    %647 = vst [vmem:[#allocation2 + $0x80] sm:$0xff] %v615
    %648 = vst [vmem:[#allocation2 + $0x88] sm:$0xff] %v616
    %649 = vst [vmem:[#allocation2 + $0x90] sm:$0xff] %v617
    %650 = vst [vmem:[#allocation2 + $0x98] sm:$0xff] %v618
    %651 = vst [vmem:[#allocation2 + $0xa0] sm:$0xff] %v619
    %652 = vst [vmem:[#allocation2 + $0xa8] sm:$0xff] %v620
    %653 = vst [vmem:[#allocation2 + $0xb0] sm:$0xff] %v621
    %654 = vst [vmem:[#allocation2 + $0xb8] sm:$0xff] %v622
    %655 = vst [vmem:[#allocation2 + $0xc0] sm:$0xff] %v623
    %656 = vst [vmem:[#allocation2 + $0xc8] sm:$0xff] %v624
    %657 = vst [vmem:[#allocation2 + $0xd0] sm:$0xff] %v625
    %658 = vst [vmem:[#allocation2 + $0xd8] sm:$0xff] %v626
    %659 = vst [vmem:[#allocation2 + $0xe0] sm:$0xff] %v627
    %660 = vst [vmem:[#allocation2 + $0xe8] sm:$0xff] %v628
    %661 = vst [vmem:[#allocation2 + $0xf0] sm:$0xff] %v629
    %662 = vst [vmem:[#allocation2 + $0xf8] sm:$0xff] %v630
    // Predicated region
    $region34: #{tpu_custom_call.1} parent=1 // pred_check
      %p663 = pneg %p50
    $region35: #{tpu_custom_call.1} parent=1 // pred_check_branch
      %665 = sbr.rel (%p663) target = $region37
    $region36: #{tpu_custom_call.1} parent=1 // pred_region
      %v666 = vld [vmem:[%s2] sm:$0xff]
      %v667 = vld [vmem:[%s2 + $0x8] sm:$0xff]
      %v668 = vld [vmem:[%s2 + $0x10] sm:$0xff]
      %v669 = vld [vmem:[%s2 + $0x18] sm:$0xff]
      %v670 = vld [vmem:[%s2 + $0x20] sm:$0xff]
      %v671 = vld [vmem:[%s2 + $0x28] sm:$0xff]
      %v672 = vld [vmem:[%s2 + $0x30] sm:$0xff]
      %v673 = vld [vmem:[%s2 + $0x38] sm:$0xff]
      %v674 = vld [vmem:[%s2 + $0x40] sm:$0xff]
      %v675 = vld [vmem:[%s2 + $0x48] sm:$0xff]
      %v676 = vld [vmem:[%s2 + $0x50] sm:$0xff]
      %v677 = vld [vmem:[%s2 + $0x58] sm:$0xff]
      %v678 = vld [vmem:[%s2 + $0x60] sm:$0xff]
      %v679 = vld [vmem:[%s2 + $0x68] sm:$0xff]
      %v680 = vld [vmem:[%s2 + $0x70] sm:$0xff]
      %v681 = vld [vmem:[%s2 + $0x78] sm:$0xff]
      %v682 = vld [vmem:[%s2 + $0x80] sm:$0xff]
      %v683 = vld [vmem:[%s2 + $0x88] sm:$0xff]
      %v684 = vld [vmem:[%s2 + $0x90] sm:$0xff]
      %v685 = vld [vmem:[%s2 + $0x98] sm:$0xff]
      %v686 = vld [vmem:[%s2 + $0xa0] sm:$0xff]
      %v687 = vld [vmem:[%s2 + $0xa8] sm:$0xff]
      %v688 = vld [vmem:[%s2 + $0xb0] sm:$0xff]
      %v689 = vld [vmem:[%s2 + $0xb8] sm:$0xff]
      %v690 = vld [vmem:[%s2 + $0xc0] sm:$0xff]
      %v691 = vld [vmem:[%s2 + $0xc8] sm:$0xff]
      %v692 = vld [vmem:[%s2 + $0xd0] sm:$0xff]
      %v693 = vld [vmem:[%s2 + $0xd8] sm:$0xff]
      %v694 = vld [vmem:[%s2 + $0xe0] sm:$0xff]
      %v695 = vld [vmem:[%s2 + $0xe8] sm:$0xff]
      %v696 = vld [vmem:[%s2 + $0xf0] sm:$0xff]
      %v697 = vld [vmem:[%s2 + $0xf8] sm:$0xff]
      %v698 = vld [vmem:[#allocation2] sm:$0xff]
      %v699 = vld [vmem:[#allocation2 + $0x8] sm:$0xff]
      %v700 = vld [vmem:[#allocation2 + $0x10] sm:$0xff]
      %v701 = vld [vmem:[#allocation2 + $0x18] sm:$0xff]
      %v702 = vld [vmem:[#allocation2 + $0x20] sm:$0xff]
      %v703 = vld [vmem:[#allocation2 + $0x28] sm:$0xff]
      %v704 = vld [vmem:[#allocation2 + $0x30] sm:$0xff]
      %v705 = vld [vmem:[#allocation2 + $0x38] sm:$0xff]
      %v706 = vld [vmem:[#allocation2 + $0x40] sm:$0xff]
      %v707 = vld [vmem:[#allocation2 + $0x48] sm:$0xff]
      %v708 = vld [vmem:[#allocation2 + $0x50] sm:$0xff]
      %v709 = vld [vmem:[#allocation2 + $0x58] sm:$0xff]
      %v710 = vld [vmem:[#allocation2 + $0x60] sm:$0xff]
      %v711 = vld [vmem:[#allocation2 + $0x68] sm:$0xff]
      %v712 = vld [vmem:[#allocation2 + $0x70] sm:$0xff]
      %v713 = vld [vmem:[#allocation2 + $0x78] sm:$0xff]
      %v714 = vld [vmem:[#allocation2 + $0x80] sm:$0xff]
      %v715 = vld [vmem:[#allocation2 + $0x88] sm:$0xff]
      %v716 = vld [vmem:[#allocation2 + $0x90] sm:$0xff]
      %v717 = vld [vmem:[#allocation2 + $0x98] sm:$0xff]
      %v718 = vld [vmem:[#allocation2 + $0xa0] sm:$0xff]
      %v719 = vld [vmem:[#allocation2 + $0xa8] sm:$0xff]
      %v720 = vld [vmem:[#allocation2 + $0xb0] sm:$0xff]
      %v721 = vld [vmem:[#allocation2 + $0xb8] sm:$0xff]
      %v722 = vld [vmem:[#allocation2 + $0xc0] sm:$0xff]
      %v723 = vld [vmem:[#allocation2 + $0xc8] sm:$0xff]
      %v724 = vld [vmem:[#allocation2 + $0xd0] sm:$0xff]
      %v725 = vld [vmem:[#allocation2 + $0xd8] sm:$0xff]
      %v726 = vld [vmem:[#allocation2 + $0xe0] sm:$0xff]
      %v727 = vld [vmem:[#allocation2 + $0xe8] sm:$0xff]
      %v728 = vld [vmem:[#allocation2 + $0xf0] sm:$0xff]
      %v729 = vld [vmem:[#allocation2 + $0xf8] sm:$0xff]
      %731 = vset.pattern.permute.xlu0 0
      %732 = vperm.xlu0 %731, %v666
      %v733 = vpop.permute.xlu0 %732
      %736 = vset.pattern.permute.xlu0 0
      %737 = vperm.xlu0 %736, %v667
      %v738 = vpop.permute.xlu0 %737
      %741 = vset.pattern.permute.xlu0 0
      %742 = vperm.xlu0 %741, %v668
      %v743 = vpop.permute.xlu0 %742
      %746 = vset.pattern.permute.xlu0 0
      %747 = vperm.xlu0 %746, %v669
      %v748 = vpop.permute.xlu0 %747
      %751 = vset.pattern.permute.xlu0 0
      %752 = vperm.xlu0 %751, %v670
      %v753 = vpop.permute.xlu0 %752
      %756 = vset.pattern.permute.xlu0 0
      %757 = vperm.xlu0 %756, %v671
      %v758 = vpop.permute.xlu0 %757
      %761 = vset.pattern.permute.xlu0 0
      %762 = vperm.xlu0 %761, %v672
      %v763 = vpop.permute.xlu0 %762
      %766 = vset.pattern.permute.xlu0 0
      %767 = vperm.xlu0 %766, %v673
      %v768 = vpop.permute.xlu0 %767
      %771 = vset.pattern.permute.xlu0 0
      %772 = vperm.xlu0 %771, %v674
      %v773 = vpop.permute.xlu0 %772
      %776 = vset.pattern.permute.xlu0 0
      %777 = vperm.xlu0 %776, %v675
      %v778 = vpop.permute.xlu0 %777
      %781 = vset.pattern.permute.xlu0 0
      %782 = vperm.xlu0 %781, %v676
      %v783 = vpop.permute.xlu0 %782
      %786 = vset.pattern.permute.xlu0 0
      %787 = vperm.xlu0 %786, %v677
      %v788 = vpop.permute.xlu0 %787
      %791 = vset.pattern.permute.xlu0 0
      %792 = vperm.xlu0 %791, %v678
      %v793 = vpop.permute.xlu0 %792
      %796 = vset.pattern.permute.xlu0 0
      %797 = vperm.xlu0 %796, %v679
      %v798 = vpop.permute.xlu0 %797
      %801 = vset.pattern.permute.xlu0 0
      %802 = vperm.xlu0 %801, %v680
      %v803 = vpop.permute.xlu0 %802
      %806 = vset.pattern.permute.xlu0 0
      %807 = vperm.xlu0 %806, %v681
      %v808 = vpop.permute.xlu0 %807
      %811 = vset.pattern.permute.xlu0 0
      %812 = vperm.xlu0 %811, %v682
      %v813 = vpop.permute.xlu0 %812
      %816 = vset.pattern.permute.xlu0 0
      %817 = vperm.xlu0 %816, %v683
      %v818 = vpop.permute.xlu0 %817
      %821 = vset.pattern.permute.xlu0 0
      %822 = vperm.xlu0 %821, %v684
      %v823 = vpop.permute.xlu0 %822
      %826 = vset.pattern.permute.xlu0 0
      %827 = vperm.xlu0 %826, %v685
      %v828 = vpop.permute.xlu0 %827
      %831 = vset.pattern.permute.xlu0 0
      %832 = vperm.xlu0 %831, %v686
      %v833 = vpop.permute.xlu0 %832
      %836 = vset.pattern.permute.xlu0 0
      %837 = vperm.xlu0 %836, %v687
      %v838 = vpop.permute.xlu0 %837
      %841 = vset.pattern.permute.xlu0 0
      %842 = vperm.xlu0 %841, %v688
      %v843 = vpop.permute.xlu0 %842
      %846 = vset.pattern.permute.xlu0 0
      %847 = vperm.xlu0 %846, %v689
      %v848 = vpop.permute.xlu0 %847
      %851 = vset.pattern.permute.xlu0 0
      %852 = vperm.xlu0 %851, %v690
      %v853 = vpop.permute.xlu0 %852
      %856 = vset.pattern.permute.xlu0 0
      %857 = vperm.xlu0 %856, %v691
      %v858 = vpop.permute.xlu0 %857
      %861 = vset.pattern.permute.xlu0 0
      %862 = vperm.xlu0 %861, %v692
      %v863 = vpop.permute.xlu0 %862
      %866 = vset.pattern.permute.xlu0 0
      %867 = vperm.xlu0 %866, %v693
      %v868 = vpop.permute.xlu0 %867
      %871 = vset.pattern.permute.xlu0 0
      %872 = vperm.xlu0 %871, %v694
      %v873 = vpop.permute.xlu0 %872
      %876 = vset.pattern.permute.xlu0 0
      %877 = vperm.xlu0 %876, %v695
      %v878 = vpop.permute.xlu0 %877
      %881 = vset.pattern.permute.xlu0 0
      %882 = vperm.xlu0 %881, %v696
      %v883 = vpop.permute.xlu0 %882
      %886 = vset.pattern.permute.xlu0 0
      %887 = vperm.xlu0 %886, %v697
      %v888 = vpop.permute.xlu0 %887
      %v890 = vmul.f32 %v733, %v698
      %v891 = vmul.f32 %v738, %v699
      %v892 = vmul.f32 %v743, %v700
      %v893 = vmul.f32 %v748, %v701
      %v894 = vmul.f32 %v753, %v702
      %v895 = vmul.f32 %v758, %v703
      %v896 = vmul.f32 %v763, %v704
      %v897 = vmul.f32 %v768, %v705
      %v898 = vmul.f32 %v773, %v706
      %v899 = vmul.f32 %v778, %v707
      %v900 = vmul.f32 %v783, %v708
      %v901 = vmul.f32 %v788, %v709
      %v902 = vmul.f32 %v793, %v710
      %v903 = vmul.f32 %v798, %v711
      %v904 = vmul.f32 %v803, %v712
      %v905 = vmul.f32 %v808, %v713
      %v906 = vmul.f32 %v813, %v714
      %v907 = vmul.f32 %v818, %v715
      %v908 = vmul.f32 %v823, %v716
      %v909 = vmul.f32 %v828, %v717
      %v910 = vmul.f32 %v833, %v718
      %v911 = vmul.f32 %v838, %v719
      %v912 = vmul.f32 %v843, %v720
      %v913 = vmul.f32 %v848, %v721
      %v914 = vmul.f32 %v853, %v722
      %v915 = vmul.f32 %v858, %v723
      %v916 = vmul.f32 %v863, %v724
      %v917 = vmul.f32 %v868, %v725
      %v918 = vmul.f32 %v873, %v726
      %v919 = vmul.f32 %v878, %v727
      %v920 = vmul.f32 %v883, %v728
      %v921 = vmul.f32 %v888, %v729
      %v922 = vld [vmem:[#allocation6] sm:$0xff]
      %v923 = vld [vmem:[#allocation6 + $0x8] sm:$0xff]
      %v924 = vld [vmem:[#allocation6 + $0x10] sm:$0xff]
      %v925 = vld [vmem:[#allocation6 + $0x18] sm:$0xff]
      %v926 = vld [vmem:[#allocation6 + $0x20] sm:$0xff]
      %v927 = vld [vmem:[#allocation6 + $0x28] sm:$0xff]
      %v928 = vld [vmem:[#allocation6 + $0x30] sm:$0xff]
      %v929 = vld [vmem:[#allocation6 + $0x38] sm:$0xff]
      %v930 = vld [vmem:[#allocation6 + $0x40] sm:$0xff]
      %v931 = vld [vmem:[#allocation6 + $0x48] sm:$0xff]
      %v932 = vld [vmem:[#allocation6 + $0x50] sm:$0xff]
      %v933 = vld [vmem:[#allocation6 + $0x58] sm:$0xff]
      %v934 = vld [vmem:[#allocation6 + $0x60] sm:$0xff]
      %v935 = vld [vmem:[#allocation6 + $0x68] sm:$0xff]
      %v936 = vld [vmem:[#allocation6 + $0x70] sm:$0xff]
      %v937 = vld [vmem:[#allocation6 + $0x78] sm:$0xff]
      %v938 = vld [vmem:[%s4] sm:$0x1]
      %v940 = vlaneseq
      %v941 = vshrl.u32 %v940, 7
      %v942 = vsub.s32 0, %v941
      %v943 = vrot.slane %v938, %v942
      %945 = vmatprep.subr.mxu0 0.0
      %946 = vmatpush1.msra.mxu0 %v937
      %947 = vmatprep.subr.mxu0 0.0
      %948 = vmatpush1.msra.mxu0 %v936
      %949 = vmatprep.subr.mxu0 0.0
      %950 = vmatpush1.msra.mxu0 %v935
      %951 = vmatprep.subr.mxu0 0.0
      %952 = vmatpush1.msra.mxu0 %v934
      %953 = vmatprep.subr.mxu0 0.0
      %954 = vmatpush1.msra.mxu0 %v933
      %955 = vmatprep.subr.mxu0 0.0
      %956 = vmatpush1.msra.mxu0 %v932
      %957 = vmatprep.subr.mxu0 0.0
      %958 = vmatpush1.msra.mxu0 %v931
      %959 = vmatprep.subr.mxu0 0.0
      %960 = vmatpush1.msra.mxu0 %v930
      %961 = vmatprep.subr.mxu0 0.0
      %962 = vmatpush1.msra.mxu0 %v929
      %963 = vmatprep.subr.mxu0 0.0
      %964 = vmatpush1.msra.mxu0 %v928
      %965 = vmatprep.subr.mxu0 0.0
      %966 = vmatpush1.msra.mxu0 %v927
      %967 = vmatprep.subr.mxu0 0.0
      %968 = vmatpush1.msra.mxu0 %v926
      %969 = vmatprep.subr.mxu0 0.0
      %970 = vmatpush1.msra.mxu0 %v925
      %971 = vmatprep.subr.mxu0 0.0
      %972 = vmatpush1.msra.mxu0 %v924
      %973 = vmatprep.subr.mxu0 0.0
      %974 = vmatpush1.msra.mxu0 %v923
      %975 = vmatprep.subr.mxu0 0.0
      %976 = vmatpush1.msra.mxu0 %v922
      %977 = vmatprep.subr.mxu0 0.0
      %978 = vmatpush2.msra.mxu0 0.0
      %979 = vmatprep.subr.mxu0 0.0
      %980 = vmatpush2.msra.mxu0 0.0
      %981 = vmatprep.subr.mxu0 0.0
      %982 = vmatpush2.msra.mxu0 0.0
      %983 = vmatprep.subr.mxu0 0.0
      %984 = vmatpush2.msra.mxu0 0.0
      %985 = vmatprep.subr.mxu0 0.0
      %986 = vmatpush2.msra.mxu0 0.0
      %987 = vmatprep.subr.mxu0 0.0
      %988 = vmatpush2.msra.mxu0 0.0
      %989 = vmatprep.subr.mxu0 0.0
      %990 = vmatpush2.msra.mxu0 0.0
      %991 = vmatprep.subr.mxu0 0.0
      %992 = vmatpush2.msra.mxu0 0.0
      %993 = vmatprep.subr.mxu0 0.0
      %994 = vmatpush2.msra.mxu0 0.0
      %995 = vmatprep.subr.mxu0 0.0
      %996 = vmatpush2.msra.mxu0 0.0
      %997 = vmatprep.subr.mxu0 0.0
      %998 = vmatpush2.msra.mxu0 0.0
      %999 = vmatprep.subr.mxu0 0.0
      %1000 = vmatpush2.msra.mxu0 0.0
      %1001 = vmatprep.subr.mxu0 0.0
      %1002 = vmatpush2.msra.mxu0 0.0
      %1003 = vmatprep.subr.mxu0 0.0
      %1004 = vmatpush2.msra.mxu0 0.0
      %1005 = vmatprep.subr.mxu0 0.0
      %1006 = vmatpush2.msra.mxu0 0.0
      %1007 = vmatprep.subr.mxu0 0.0
      %1008 = vmatpush2.msra.mxu0 0.0
      %1009 = vmatprep.mubr.f32.mxu0 0.0
      %1010 = vmatmul.mubr.f32.gmra.mxu0 %v890
      %v1011 = vpop.f32.mrf.mxu0
      %v1012 = vadd.f32 %v943, %v1011
      %v1013 = vpop.f32.mrf.mxu0
      %1014 = vmatprep.mubr.f32.mxu0 0.0
      %1015 = vmatmul.mubr.f32.gmra.mxu0 %v891
      %v1016 = vpop.f32.mrf.mxu0
      %v1017 = vadd.f32 %v943, %v1016
      %v1018 = vpop.f32.mrf.mxu0
      %1019 = vmatprep.mubr.f32.mxu0 0.0
      %1020 = vmatmul.mubr.f32.gmra.mxu0 %v892
      %v1021 = vpop.f32.mrf.mxu0
      %v1022 = vadd.f32 %v943, %v1021
      %v1023 = vpop.f32.mrf.mxu0
      %1024 = vmatprep.mubr.f32.mxu0 0.0
      %1025 = vmatmul.mubr.f32.gmra.mxu0 %v893
      %v1026 = vpop.f32.mrf.mxu0
      %v1027 = vadd.f32 %v943, %v1026
      %v1028 = vpop.f32.mrf.mxu0
      %1029 = vmatprep.mubr.f32.mxu0 0.0
      %1030 = vmatmul.mubr.f32.gmra.mxu0 %v894
      %v1031 = vpop.f32.mrf.mxu0
      %v1032 = vadd.f32 %v943, %v1031
      %v1033 = vpop.f32.mrf.mxu0
      %1034 = vmatprep.mubr.f32.mxu0 0.0
      %1035 = vmatmul.mubr.f32.gmra.mxu0 %v895
      %v1036 = vpop.f32.mrf.mxu0
      %v1037 = vadd.f32 %v943, %v1036
      %v1038 = vpop.f32.mrf.mxu0
      %1039 = vmatprep.mubr.f32.mxu0 0.0
      %1040 = vmatmul.mubr.f32.gmra.mxu0 %v896
      %v1041 = vpop.f32.mrf.mxu0
      %v1042 = vadd.f32 %v943, %v1041
      %v1043 = vpop.f32.mrf.mxu0
      %1044 = vmatprep.mubr.f32.mxu0 0.0
      %1045 = vmatmul.mubr.f32.gmra.mxu0 %v897
      %v1046 = vpop.f32.mrf.mxu0
      %v1047 = vadd.f32 %v943, %v1046
      %v1048 = vpop.f32.mrf.mxu0
      %1049 = vmatprep.mubr.f32.mxu0 0.0
      %1050 = vmatmul.mubr.f32.gmra.mxu0 %v898
      %v1051 = vpop.f32.mrf.mxu0
      %v1052 = vadd.f32 %v943, %v1051
      %v1053 = vpop.f32.mrf.mxu0
      %1054 = vmatprep.mubr.f32.mxu0 0.0
      %1055 = vmatmul.mubr.f32.gmra.mxu0 %v899
      %v1056 = vpop.f32.mrf.mxu0
      %v1057 = vadd.f32 %v943, %v1056
      %v1058 = vpop.f32.mrf.mxu0
      %1059 = vmatprep.mubr.f32.mxu0 0.0
      %1060 = vmatmul.mubr.f32.gmra.mxu0 %v900
      %v1061 = vpop.f32.mrf.mxu0
      %v1062 = vadd.f32 %v943, %v1061
      %v1063 = vpop.f32.mrf.mxu0
      %1064 = vmatprep.mubr.f32.mxu0 0.0
      %1065 = vmatmul.mubr.f32.gmra.mxu0 %v901
      %v1066 = vpop.f32.mrf.mxu0
      %v1067 = vadd.f32 %v943, %v1066
      %v1068 = vpop.f32.mrf.mxu0
      %1069 = vmatprep.mubr.f32.mxu0 0.0
      %1070 = vmatmul.mubr.f32.gmra.mxu0 %v902
      %v1071 = vpop.f32.mrf.mxu0
      %v1072 = vadd.f32 %v943, %v1071
      %v1073 = vpop.f32.mrf.mxu0
      %1074 = vmatprep.mubr.f32.mxu0 0.0
      %1075 = vmatmul.mubr.f32.gmra.mxu0 %v903
      %v1076 = vpop.f32.mrf.mxu0
      %v1077 = vadd.f32 %v943, %v1076
      %v1078 = vpop.f32.mrf.mxu0
      %1079 = vmatprep.mubr.f32.mxu0 0.0
      %1080 = vmatmul.mubr.f32.gmra.mxu0 %v904
      %v1081 = vpop.f32.mrf.mxu0
      %v1082 = vadd.f32 %v943, %v1081
      %v1083 = vpop.f32.mrf.mxu0
      %1084 = vmatprep.mubr.f32.mxu0 0.0
      %1085 = vmatmul.mubr.f32.gmra.mxu0 %v905
      %v1086 = vpop.f32.mrf.mxu0
      %v1087 = vadd.f32 %v943, %v1086
      %v1088 = vpop.f32.mrf.mxu0
      %1089 = vmatprep.mubr.f32.mxu0 0.0
      %1090 = vmatmul.mubr.f32.gmra.mxu0 %v906
      %v1091 = vpop.f32.mrf.mxu0
      %v1092 = vadd.f32 %v943, %v1091
      %v1093 = vpop.f32.mrf.mxu0
      %1094 = vmatprep.mubr.f32.mxu0 0.0
      %1095 = vmatmul.mubr.f32.gmra.mxu0 %v907
      %v1096 = vpop.f32.mrf.mxu0
      %v1097 = vadd.f32 %v943, %v1096
      %v1098 = vpop.f32.mrf.mxu0
      %1099 = vmatprep.mubr.f32.mxu0 0.0
      %1100 = vmatmul.mubr.f32.gmra.mxu0 %v908
      %v1101 = vpop.f32.mrf.mxu0
      %v1102 = vadd.f32 %v943, %v1101
      %v1103 = vpop.f32.mrf.mxu0
      %1104 = vmatprep.mubr.f32.mxu0 0.0
      %1105 = vmatmul.mubr.f32.gmra.mxu0 %v909
      %v1106 = vpop.f32.mrf.mxu0
      %v1107 = vadd.f32 %v943, %v1106
      %v1108 = vpop.f32.mrf.mxu0
      %1109 = vmatprep.mubr.f32.mxu0 0.0
      %1110 = vmatmul.mubr.f32.gmra.mxu0 %v910
      %v1111 = vpop.f32.mrf.mxu0
      %v1112 = vadd.f32 %v943, %v1111
      %v1113 = vpop.f32.mrf.mxu0
      %1114 = vmatprep.mubr.f32.mxu0 0.0
      %1115 = vmatmul.mubr.f32.gmra.mxu0 %v911
      %v1116 = vpop.f32.mrf.mxu0
      %v1117 = vadd.f32 %v943, %v1116
      %v1118 = vpop.f32.mrf.mxu0
      %1119 = vmatprep.mubr.f32.mxu0 0.0
      %1120 = vmatmul.mubr.f32.gmra.mxu0 %v912
      %v1121 = vpop.f32.mrf.mxu0
      %v1122 = vadd.f32 %v943, %v1121
      %v1123 = vpop.f32.mrf.mxu0
      %1124 = vmatprep.mubr.f32.mxu0 0.0
      %1125 = vmatmul.mubr.f32.gmra.mxu0 %v913
      %v1126 = vpop.f32.mrf.mxu0
      %v1127 = vadd.f32 %v943, %v1126
      %v1128 = vpop.f32.mrf.mxu0
      %1129 = vmatprep.mubr.f32.mxu0 0.0
      %1130 = vmatmul.mubr.f32.gmra.mxu0 %v914
      %v1131 = vpop.f32.mrf.mxu0
      %v1132 = vadd.f32 %v943, %v1131
      %v1133 = vpop.f32.mrf.mxu0
      %1134 = vmatprep.mubr.f32.mxu0 0.0
      %1135 = vmatmul.mubr.f32.gmra.mxu0 %v915
      %v1136 = vpop.f32.mrf.mxu0
      %v1137 = vadd.f32 %v943, %v1136
      %v1138 = vpop.f32.mrf.mxu0
      %1139 = vmatprep.mubr.f32.mxu0 0.0
      %1140 = vmatmul.mubr.f32.gmra.mxu0 %v916
      %v1141 = vpop.f32.mrf.mxu0
      %v1142 = vadd.f32 %v943, %v1141
      %v1143 = vpop.f32.mrf.mxu0
      %1144 = vmatprep.mubr.f32.mxu0 0.0
      %1145 = vmatmul.mubr.f32.gmra.mxu0 %v917
      %v1146 = vpop.f32.mrf.mxu0
      %v1147 = vadd.f32 %v943, %v1146
      %v1148 = vpop.f32.mrf.mxu0
      %1149 = vmatprep.mubr.f32.mxu0 0.0
      %1150 = vmatmul.mubr.f32.gmra.mxu0 %v918
      %v1151 = vpop.f32.mrf.mxu0
      %v1152 = vadd.f32 %v943, %v1151
      %v1153 = vpop.f32.mrf.mxu0
      %1154 = vmatprep.mubr.f32.mxu0 0.0
      %1155 = vmatmul.mubr.f32.gmra.mxu0 %v919
      %v1156 = vpop.f32.mrf.mxu0
      %v1157 = vadd.f32 %v943, %v1156
      %v1158 = vpop.f32.mrf.mxu0
      %1159 = vmatprep.mubr.f32.mxu0 0.0
      %1160 = vmatmul.mubr.f32.gmra.mxu0 %v920
      %v1161 = vpop.f32.mrf.mxu0
      %v1162 = vadd.f32 %v943, %v1161
      %v1163 = vpop.f32.mrf.mxu0
      %1164 = vmatprep.mubr.f32.mxu0 0.0
      %1165 = vmatmul.mubr.f32.gmra.mxu0 %v921
      %v1166 = vpop.f32.mrf.mxu0
      %v1167 = vadd.f32 %v943, %v1166
      %v1168 = vpop.f32.mrf.mxu0
      %1169 = vdwg.mxu0
      %v1170 = vmax.f32 %v1012, 0.0
      %v1171 = vmax.f32 %v1017, 0.0
      %v1172 = vmax.f32 %v1022, 0.0
      %v1173 = vmax.f32 %v1027, 0.0
      %v1174 = vmax.f32 %v1032, 0.0
      %v1175 = vmax.f32 %v1037, 0.0
      %v1176 = vmax.f32 %v1042, 0.0
      %v1177 = vmax.f32 %v1047, 0.0
      %v1178 = vmax.f32 %v1052, 0.0
      %v1179 = vmax.f32 %v1057, 0.0
      %v1180 = vmax.f32 %v1062, 0.0
      %v1181 = vmax.f32 %v1067, 0.0
      %v1182 = vmax.f32 %v1072, 0.0
      %v1183 = vmax.f32 %v1077, 0.0
      %v1184 = vmax.f32 %v1082, 0.0
      %v1185 = vmax.f32 %v1087, 0.0
      %v1186 = vmax.f32 %v1092, 0.0
      %v1187 = vmax.f32 %v1097, 0.0
      %v1188 = vmax.f32 %v1102, 0.0
      %v1189 = vmax.f32 %v1107, 0.0
      %v1190 = vmax.f32 %v1112, 0.0
      %v1191 = vmax.f32 %v1117, 0.0
      %v1192 = vmax.f32 %v1122, 0.0
      %v1193 = vmax.f32 %v1127, 0.0
      %v1194 = vmax.f32 %v1132, 0.0
      %v1195 = vmax.f32 %v1137, 0.0
      %v1196 = vmax.f32 %v1142, 0.0
      %v1197 = vmax.f32 %v1147, 0.0
      %v1198 = vmax.f32 %v1152, 0.0
      %v1199 = vmax.f32 %v1157, 0.0
      %v1200 = vmax.f32 %v1162, 0.0
      %v1201 = vmax.f32 %v1167, 0.0
      %v1202 = vmul.f32 %v733, %v1170
      %v1203 = vmul.f32 %v738, %v1171
      %v1204 = vmul.f32 %v743, %v1172
      %v1205 = vmul.f32 %v748, %v1173
      %v1206 = vmul.f32 %v753, %v1174
      %v1207 = vmul.f32 %v758, %v1175
      %v1208 = vmul.f32 %v763, %v1176
      %v1209 = vmul.f32 %v768, %v1177
      %v1210 = vmul.f32 %v773, %v1178
      %v1211 = vmul.f32 %v778, %v1179
      %v1212 = vmul.f32 %v783, %v1180
      %v1213 = vmul.f32 %v788, %v1181
      %v1214 = vmul.f32 %v793, %v1182
      %v1215 = vmul.f32 %v798, %v1183
      %v1216 = vmul.f32 %v803, %v1184
      %v1217 = vmul.f32 %v808, %v1185
      %v1218 = vmul.f32 %v813, %v1186
      %v1219 = vmul.f32 %v818, %v1187
      %v1220 = vmul.f32 %v823, %v1188
      %v1221 = vmul.f32 %v828, %v1189
      %v1222 = vmul.f32 %v833, %v1190
      %v1223 = vmul.f32 %v838, %v1191
      %v1224 = vmul.f32 %v843, %v1192
      %v1225 = vmul.f32 %v848, %v1193
      %v1226 = vmul.f32 %v853, %v1194
      %v1227 = vmul.f32 %v858, %v1195
      %v1228 = vmul.f32 %v863, %v1196
      %v1229 = vmul.f32 %v868, %v1197
      %v1230 = vmul.f32 %v873, %v1198
      %v1231 = vmul.f32 %v878, %v1199
      %v1232 = vmul.f32 %v883, %v1200
      %v1233 = vmul.f32 %v888, %v1201
      %v1234 = vpack.c.bf16 %v1203, %v1202
      %v1235 = vpack.c.bf16 %v1205, %v1204
      %v1236 = vpack.c.bf16 %v1207, %v1206
      %v1237 = vpack.c.bf16 %v1209, %v1208
      %v1238 = vpack.c.bf16 %v1211, %v1210
      %v1239 = vpack.c.bf16 %v1213, %v1212
      %v1240 = vpack.c.bf16 %v1215, %v1214
      %v1241 = vpack.c.bf16 %v1217, %v1216
      %v1242 = vpack.c.bf16 %v1219, %v1218
      %v1243 = vpack.c.bf16 %v1221, %v1220
      %v1244 = vpack.c.bf16 %v1223, %v1222
      %v1245 = vpack.c.bf16 %v1225, %v1224
      %v1246 = vpack.c.bf16 %v1227, %v1226
      %v1247 = vpack.c.bf16 %v1229, %v1228
      %v1248 = vpack.c.bf16 %v1231, %v1230
      %v1249 = vpack.c.bf16 %v1233, %v1232
      %v1266 = vunpack.c.l.b16 %v1234
      %v1267 = vunpack.c.h.b16 %v1234
      %v1268 = vunpack.c.l.b16 %v1235
      %v1269 = vunpack.c.h.b16 %v1235
      %v1270 = vunpack.c.l.b16 %v1236
      %v1271 = vunpack.c.h.b16 %v1236
      %v1272 = vunpack.c.l.b16 %v1237
      %v1273 = vunpack.c.h.b16 %v1237
      %v1274 = vunpack.c.l.b16 %v1238
      %v1275 = vunpack.c.h.b16 %v1238
      %v1276 = vunpack.c.l.b16 %v1239
      %v1277 = vunpack.c.h.b16 %v1239
      %v1278 = vunpack.c.l.b16 %v1240
      %v1279 = vunpack.c.h.b16 %v1240
      %v1280 = vunpack.c.l.b16 %v1241
      %v1281 = vunpack.c.h.b16 %v1241
      %v1282 = vunpack.c.l.b16 %v1242
      %v1283 = vunpack.c.h.b16 %v1242
      %v1284 = vunpack.c.l.b16 %v1243
      %v1285 = vunpack.c.h.b16 %v1243
      %v1286 = vunpack.c.l.b16 %v1244
      %v1287 = vunpack.c.h.b16 %v1244
      %v1288 = vunpack.c.l.b16 %v1245
      %v1289 = vunpack.c.h.b16 %v1245
      %v1290 = vunpack.c.l.b16 %v1246
      %v1291 = vunpack.c.h.b16 %v1246
      %v1292 = vunpack.c.l.b16 %v1247
      %v1293 = vunpack.c.h.b16 %v1247
      %v1294 = vunpack.c.l.b16 %v1248
      %v1295 = vunpack.c.h.b16 %v1248
      %v1296 = vunpack.c.l.b16 %v1249
      %v1297 = vunpack.c.h.b16 %v1249
      %v1298 = vpack.c.b16 %v1266, %v1266
      %v1299 = vpack.c.b16 %v1267, %v1267
      %v1300 = vpack.c.b16 %v1268, %v1268
      %v1301 = vpack.c.b16 %v1269, %v1269
      %v1302 = vpack.c.b16 %v1270, %v1270
      %v1303 = vpack.c.b16 %v1271, %v1271
      %v1304 = vpack.c.b16 %v1272, %v1272
      %v1305 = vpack.c.b16 %v1273, %v1273
      %v1306 = vpack.c.b16 %v1274, %v1274
      %v1307 = vpack.c.b16 %v1275, %v1275
      %v1308 = vpack.c.b16 %v1276, %v1276
      %v1309 = vpack.c.b16 %v1277, %v1277
      %v1310 = vpack.c.b16 %v1278, %v1278
      %v1311 = vpack.c.b16 %v1279, %v1279
      %v1312 = vpack.c.b16 %v1280, %v1280
      %v1313 = vpack.c.b16 %v1281, %v1281
      %v1314 = vpack.c.b16 %v1282, %v1282
      %v1315 = vpack.c.b16 %v1283, %v1283
      %v1316 = vpack.c.b16 %v1284, %v1284
      %v1317 = vpack.c.b16 %v1285, %v1285
      %v1318 = vpack.c.b16 %v1286, %v1286
      %v1319 = vpack.c.b16 %v1287, %v1287
      %v1320 = vpack.c.b16 %v1288, %v1288
      %v1321 = vpack.c.b16 %v1289, %v1289
      %v1322 = vpack.c.b16 %v1290, %v1290
      %v1323 = vpack.c.b16 %v1291, %v1291
      %v1324 = vpack.c.b16 %v1292, %v1292
      %v1325 = vpack.c.b16 %v1293, %v1293
      %v1326 = vpack.c.b16 %v1294, %v1294
      %v1327 = vpack.c.b16 %v1295, %v1295
      %v1328 = vpack.c.b16 %v1296, %v1296
      %v1329 = vpack.c.b16 %v1297, %v1297
      %1362 = vst [vmem:[#allocation8] sm:$0xf] %v1298
      %1363 = vst [vmem:[#allocation8 + $0x4] sm:$0xf] %v1299
      %1364 = vst [vmem:[#allocation8 + $0x8] sm:$0xf] %v1300
      %1365 = vst [vmem:[#allocation8 + $0xc] sm:$0xf] %v1301
      %1366 = vst [vmem:[#allocation8 + $0x10] sm:$0xf] %v1302
      %1367 = vst [vmem:[#allocation8 + $0x14] sm:$0xf] %v1303
      %1368 = vst [vmem:[#allocation8 + $0x18] sm:$0xf] %v1304
      %1369 = vst [vmem:[#allocation8 + $0x1c] sm:$0xf] %v1305
      %1370 = vst [vmem:[#allocation8 + $0x20] sm:$0xf] %v1306
      %1371 = vst [vmem:[#allocation8 + $0x24] sm:$0xf] %v1307
      %1372 = vst [vmem:[#allocation8 + $0x28] sm:$0xf] %v1308
      %1373 = vst [vmem:[#allocation8 + $0x2c] sm:$0xf] %v1309
      %1374 = vst [vmem:[#allocation8 + $0x30] sm:$0xf] %v1310
      %1375 = vst [vmem:[#allocation8 + $0x34] sm:$0xf] %v1311
      %1376 = vst [vmem:[#allocation8 + $0x38] sm:$0xf] %v1312
      %1377 = vst [vmem:[#allocation8 + $0x3c] sm:$0xf] %v1313
      %1378 = vst [vmem:[#allocation8 + $0x40] sm:$0xf] %v1314
      %1379 = vst [vmem:[#allocation8 + $0x44] sm:$0xf] %v1315
      %1380 = vst [vmem:[#allocation8 + $0x48] sm:$0xf] %v1316
      %1381 = vst [vmem:[#allocation8 + $0x4c] sm:$0xf] %v1317
      %1382 = vst [vmem:[#allocation8 + $0x50] sm:$0xf] %v1318
      %1383 = vst [vmem:[#allocation8 + $0x54] sm:$0xf] %v1319
      %1384 = vst [vmem:[#allocation8 + $0x58] sm:$0xf] %v1320
      %1385 = vst [vmem:[#allocation8 + $0x5c] sm:$0xf] %v1321
      %1386 = vst [vmem:[#allocation8 + $0x60] sm:$0xf] %v1322
      %1387 = vst [vmem:[#allocation8 + $0x64] sm:$0xf] %v1323
      %1388 = vst [vmem:[#allocation8 + $0x68] sm:$0xf] %v1324
      %1389 = vst [vmem:[#allocation8 + $0x6c] sm:$0xf] %v1325
      %1390 = vst [vmem:[#allocation8 + $0x70] sm:$0xf] %v1326
      %1391 = vst [vmem:[#allocation8 + $0x74] sm:$0xf] %v1327
      %1392 = vst [vmem:[#allocation8 + $0x78] sm:$0xf] %v1328
      %1393 = vst [vmem:[#allocation8 + $0x7c] sm:$0xf] %v1329
    $region37: #{tpu_custom_call.1} parent=1 // pred_fallthru
      _
    // Predicated region
    $region38: #{tpu_custom_call.1} parent=1 // pred_check
      _
    $region39: #{tpu_custom_call.1} parent=1 // pred_check_branch
      %1395 = sbr.rel (0) target = $region41
    $region40: #{tpu_custom_call.1} parent=1 // pred_region
      %s1397 = ssub.s32 2048, 2048
      %1398 = vsyncadd [#allocation5], %s1397
      %s1399 = sshll.u32 [#allocation8], 4
      %s1400 = int_to_ptr.vmem [resolvable:$true] %s1399
      %1405 = dma.vmem_to_hbm [thread:$0]  %s1400, 2048, %s5, [#allocation5], 64, 64, 4
    $region41: #{tpu_custom_call.1} parent=1 // pred_fallthru
      _
    // Predicated region
    $region42: #{tpu_custom_call.1} parent=1 // pred_check
      _
    $region43: #{tpu_custom_call.1} parent=1 // pred_check_branch
      %1407 = sbr.rel (0) target = $region45
    $region44: #{tpu_custom_call.1} parent=1 // pred_region
      %1408 = dma.done [#allocation5], 2048
    $region45: #{tpu_custom_call.1} parent=1 // pred_fallthru
      _
    %1409 = vsyncpa [#allocation4], 1
    %1410 = vsyncpa [#allocation7], 1
    %1411 = vsyncpa [#allocation5], 1

</llo_original>
